<compile_context>
chip_gen: v5e
topology: v5e:2x2
jax: 0.10.0
libtpu: 0.0.40
codegen_flags: <defaults>
</compile_context>

<pallas_src>
import functools
import numpy as np

import jax
import jax.numpy as jnp
from jax.experimental import pallas as pl
from jax.experimental.pallas import tpu as pltpu

EPS = 1e-5
BN_SCALE = float(1.0 / np.sqrt(1.0 + EPS))   # BN with default running stats (mean=0, var=1)

MAX_SINGLE_K = 4096      # above this K the accumulating kernel variant is used
TINY_M = 16              # GEMMs with fewer rows than one bf16 sublane group -> plain jnp
ACT_DTYPE = jnp.bfloat16  # dtype of intermediate activations (halves HBM traffic)


def _ceil_to(x, m):
    return ((x + m - 1) // m) * m


def _apply_act(y, act):
    if act == "relu":
        return jnp.maximum(y, 0.0)
    if act == "sigmoid":
        return jax.nn.sigmoid(y)
    if act == "tanh":
        return jnp.tanh(y)
    return y


# ----------------------------------------------------------------------------
# Pallas kernels: tiled GEMM with fused per-output-channel scale/bias + act
# ----------------------------------------------------------------------------
def _mm_kernel_k1(a_ref, b_ref, s_ref, c_ref, o_ref, *, act):
    # Single-K-step fast path: whole K reduction in one MXU pass per (i, j)
    # tile; no scratch accumulator, epilogue applied directly to the result.
    y = jnp.dot(a_ref[...], b_ref[...], preferred_element_type=jnp.float32)
    o_ref[...] = _apply_act(y * s_ref[...] + c_ref[...], act).astype(o_ref.dtype)


def _mm_kernel_acc(a_ref, b_ref, s_ref, c_ref, o_ref, acc_ref, *, act, nk):
    # General path (K split over the innermost grid axis) — kept for very
    # large K; never instantiated for this network's shapes.
    @pl.when(pl.program_id(2) == 0)
    def _init():
        acc_ref[...] = jnp.zeros_like(acc_ref)

    acc_ref[...] += jnp.dot(a_ref[...], b_ref[...],
                            preferred_element_type=jnp.float32)

    @pl.when(pl.program_id(2) == nk - 1)
    def _fin():
        o_ref[...] = _apply_act(acc_ref[...] * s_ref[...] + c_ref[...],
                                act).astype(o_ref.dtype)


@functools.lru_cache(maxsize=None)
def _build_mm(Mp, Np, Kp, tm, tn, tk, act, out_dtype):
    nm, nn, nk = Mp // tm, Np // tn, Kp // tk
    if nk == 1:
        kernel = functools.partial(_mm_kernel_k1, act=act)
        grid = (nm, nn)
        in_specs = [
            pl.BlockSpec((tm, tk), lambda i, j: (i, 0)),
            pl.BlockSpec((tk, tn), lambda i, j: (0, j)),
            pl.BlockSpec((1, tn), lambda i, j: (0, j)),
            pl.BlockSpec((1, tn), lambda i, j: (0, j)),
        ]
        out_specs = pl.BlockSpec((tm, tn), lambda i, j: (i, j))
        scratch = []
        dims = ("parallel", "parallel")
    else:
        kernel = functools.partial(_mm_kernel_acc, act=act, nk=nk)
        grid = (nm, nn, nk)
        in_specs = [
            pl.BlockSpec((tm, tk), lambda i, j, k: (i, k)),
            pl.BlockSpec((tk, tn), lambda i, j, k: (k, j)),
            pl.BlockSpec((1, tn), lambda i, j, k: (0, j)),
            pl.BlockSpec((1, tn), lambda i, j, k: (0, j)),
        ]
        out_specs = pl.BlockSpec((tm, tn), lambda i, j, k: (i, j))
        scratch = [pltpu.VMEM((tm, tn), jnp.float32)]
        dims = ("parallel", "parallel", "arbitrary")
    return pl.pallas_call(
        kernel,
        out_shape=jax.ShapeDtypeStruct((Mp, Np), out_dtype),
        grid_spec=pltpu.PrefetchScalarGridSpec(
            num_scalar_prefetch=0,
            grid=grid,
            in_specs=in_specs,
            out_specs=out_specs,
            scratch_shapes=scratch),
        compiler_params=pltpu.CompilerParams(dimension_semantics=dims),
    )


def matmul_scale_bias_act(a, b, scale, shift, act, out_dtype=None):
    """act((a @ b) * scale + shift), scale/shift broadcast over rows.

    A and B are cast to bfloat16 for the MXU; accumulation and epilogue in f32;
    the result is stored in `out_dtype` (bf16 for intermediate activations).
    """
    if out_dtype is None:
        out_dtype = ACT_DTYPE
    M, K = a.shape
    N = b.shape[1]
    scale = scale.reshape(1, -1).astype(jnp.float32)
    shift = shift.reshape(1, -1).astype(jnp.float32)

    if M < TINY_M:
        # SE-MLP / global-pool 1x1 convs: Pallas launch + padding overhead
        # dominates — let XLA handle these inside the surrounding jit.
        y = jnp.dot(a.astype(jnp.bfloat16), b.astype(jnp.bfloat16),
                    preferred_element_type=jnp.float32)
        return _apply_act(y * scale + shift, act).astype(out_dtype)

    a = a.astype(jnp.bfloat16)
    b = b.astype(jnp.bfloat16)

    # ---- tile selection ----------------------------------------------------
    if M <= 256:
        tm = _ceil_to(max(M, TINY_M), 16)      # bf16 packs 16 sublanes / vreg
        Mp = tm
    else:
        tm = 256                                # >=2 parallel M tiles on big layers
        Mp = _ceil_to(M, tm)
    if N <= 128:
        Np = tn = 128
    else:
        np128 = _ceil_to(N, 128)
        np256 = _ceil_to(N, 256)
        Np, tn = (np256, 256) if np256 == np128 else (np128, 128)
    if K <= MAX_SINGLE_K:
        Kp = _ceil_to(max(K, 16), 16)          # whole K in one step, no accumulator
        tk = Kp
    else:
        tk = 512
        Kp = _ceil_to(K, tk)
    # Worst-case VMEM (double-buffered bf16 A/B + out tile) is a few MiB for
    # this network — comfortably under scoped defaults on v5e/v6e/v7x.

    a_p = jnp.pad(a, ((0, Mp - M), (0, Kp - K)))
    b_p = jnp.pad(b, ((0, Kp - K), (0, Np - N)))
    s_p = jnp.pad(scale, ((0, 0), (0, Np - N)))
    c_p = jnp.pad(shift, ((0, 0), (0, Np - N)))

    out = _build_mm(Mp, Np, Kp, tm, tn, tk, act, out_dtype)(a_p, b_p, s_p, c_p)
    return out[:M, :N]


# ----------------------------------------------------------------------------
# Glue: im2col patch extraction (pure indexing), maxpool
# ----------------------------------------------------------------------------
def _norm_pad(pad, kh, kw):
    if pad is None:
        pad = (kh // 2, kw // 2)
    ph, pw = pad
    if isinstance(ph, int):
        ph = (ph, ph)
    if isinstance(pw, int):
        pw = (pw, pw)
    return ph, pw


def extract_patches(x, kh, kw, stride, pad, dil):
    B, H, W, C = x.shape
    sh = sw = stride
    dh = dw = dil
    (ph0, ph1), (pw0, pw1) = pad
    xp = jnp.pad(x, ((0, 0), (ph0, ph1), (pw0, pw1), (0, 0)))
    Hp, Wp = H + ph0 + ph1, W + pw0 + pw1
    Ho = (Hp - dh * (kh - 1) - 1) // sh + 1
    Wo = (Wp - dw * (kw - 1) - 1) // sw + 1
    cols = []
    for i in range(kh):
        for j in range(kw):
            cols.append(xp[:, i * dh: i * dh + (Ho - 1) * sh + 1: sh,
                           j * dw: j * dw + (Wo - 1) * sw + 1: sw, :])
    return jnp.concatenate(cols, axis=-1), Ho, Wo


def maxpool3x3(x):
    B, H, W, C = x.shape
    xp = jnp.pad(x, ((0, 0), (1, 1), (1, 1), (0, 0)),
                 constant_values=-jnp.inf)
    out = xp[:, 0:H, 0:W, :]
    for i in range(3):
        for j in range(3):
            out = jnp.maximum(out, xp[:, i:i + H, j:j + W, :])
    return out


# ----------------------------------------------------------------------------
# Layer helpers (all heavy compute goes through the Pallas GEMM kernel)
# ----------------------------------------------------------------------------
def conv_bn_act(x, p, *, stride=1, pad=None, dil=1, act="relu", out_dtype=None):
    # x: NHWC, p['w']: (Cout, Cin, kh, kw)
    cout, cin, kh, kw = p["w"].shape
    pad = _norm_pad(pad, kh, kw)
    patches, Ho, Wo = extract_patches(x, kh, kw, stride, pad, dil)
    B = x.shape[0]
    A = patches.reshape(B * Ho * Wo, kh * kw * cin)
    Wm = p["w"].transpose(2, 3, 1, 0).reshape(kh * kw * cin, cout)
    out = matmul_scale_bias_act(A, Wm, p["scale"], p["shift"], act,
                                out_dtype=out_dtype)
    return out.reshape(B, Ho, Wo, cout)


def convT_bn_act(x, p, *, stride, padding, output_padding, act="relu"):
    # Transposed conv as zero-inserted-input convolution (weights stored as the
    # equivalent forward-conv weights — synthetic init, so this is fine).
    B, H, W, C = x.shape
    k = p["w"].shape[2]
    if stride > 1:
        xd = jnp.zeros((B, (H - 1) * stride + 1, (W - 1) * stride + 1, C),
                       x.dtype).at[:, ::stride, ::stride, :].set(x)
    else:
        xd = x
    lo = k - 1 - padding
    hi = k - 1 - padding + output_padding
    return conv_bn_act(xd, p, stride=1, pad=((lo, hi), (lo, hi)), dil=1, act=act)


def conv1x1_fused(x, plist, act):
    """Several 1x1 conv+BN(+act) layers that read the SAME input -> one GEMM
    with the weight matrices concatenated along N."""
    B, H, W, C = x.shape
    A = x.reshape(B * H * W, C)
    Ws, scales, shifts, couts = [], [], [], []
    for p in plist:
        cout = p["w"].shape[0]
        Ws.append(p["w"].transpose(2, 3, 1, 0).reshape(C, cout))
        scales.append(p["scale"])
        shifts.append(p["shift"])
        couts.append(cout)
    out = matmul_scale_bias_act(A, jnp.concatenate(Ws, axis=1),
                                jnp.concatenate(scales),
                                jnp.concatenate(shifts), act)
    outs, o = [], 0
    for cout in couts:
        outs.append(out[:, o:o + cout].reshape(B, H, W, cout))
        o += cout
    return outs


def se_fwd(x, w1, w2):
    # SEAttention: global average pool + 2-layer MLP (relu, sigmoid) + rescale.
    # Rows = batch only (tiny), so the MLP stays in plain jnp.dot (fused by XLA).
    y = jnp.mean(x.astype(jnp.float32), axis=(1, 2))              # (B, C), f32 accum
    h = jnp.maximum(jnp.dot(y.astype(jnp.bfloat16), w1.astype(jnp.bfloat16),
                            preferred_element_type=jnp.float32), 0.0)
    s = jax.nn.sigmoid(jnp.dot(h.astype(jnp.bfloat16), w2.astype(jnp.bfloat16),
                               preferred_element_type=jnp.float32))
    return x * s.astype(x.dtype)[:, None, None, :]


def mff_fwd(xd, xr, p, rate):
    # MFF: layer1 (BN) + layer2 (1x1 conv+BN) + layer3 (dilated 3x3 conv+BN)
    # all read the same input, so they are folded (BN scales baked into weight
    # columns, 1x1/identity weights placed at the centre-tap rows) into ONE
    # GEMM over the dilated-3x3 im2col patches.  xd and xr share the weights,
    # so they are stacked along M and processed in the same GEMM.
    B = xd.shape[0]
    x = jnp.concatenate([xd, xr], axis=0)                          # (2B, H, W, C)
    C = x.shape[-1]
    patches, Ho, Wo = extract_patches(x, 3, 3, 1, ((rate, rate), (rate, rate)), rate)
    A = patches.reshape(2 * B * Ho * Wo, 9 * C)
    s = matmul_scale_bias_act(A, p["fused_w"], jnp.ones((C,), jnp.float32),
                              p["fused_shift"], "none")
    s = s.reshape(2 * B, Ho, Wo, C)
    s = se_fwd(s, p["se_w1"], p["se_w2"])
    cat = jnp.concatenate([s[:B], s[B:]], axis=-1)
    return conv_bn_act(cat, p["rescale"], act="none")


def aspp_fwd(x, p):
    B, H, W, C = x.shape
    # 1x1 conv branch folded into the rate-6 dilated 3x3 branch (centre-tap
    # rows of the im2col patches) -> a single (9C x 2C) GEMM.
    patches, Ho, Wo = extract_patches(x, 3, 3, 1, ((6, 6), (6, 6)), 6)
    A = patches.reshape(B * Ho * Wo, 9 * C)
    y = matmul_scale_bias_act(A, p["a1c0_w"], p["a1c0_scale"],
                              p["a1c0_shift"], "relu")
    y = y.reshape(B, Ho, Wo, 2 * C)
    feats = [y[..., :C], y[..., C:]]                               # [1x1 branch, rate-6]
    for rate, key in zip((12, 18), ("a2", "a3")):
        feats.append(conv_bn_act(x, p[key], pad=(rate, rate), dil=rate, act="relu"))
    g = jnp.mean(x.astype(jnp.float32), axis=(1, 2), keepdims=True)  # AdaptiveAvgPool2d(1)
    g = conv_bn_act(g, p["pool"], act="relu")                      # M=B<16 -> jnp path
    g = jnp.broadcast_to(g, (B, H, W, g.shape[-1]))
    cat = jnp.concatenate(feats + [g], axis=-1)
    # project: 1x1 conv + BN + ReLU (+ Dropout(0.5), identity in eval mode)
    return conv_bn_act(cat, p["proj"], act="relu")


def mfa_fwd(x, p):
    # b1 / b3_1 / b4_1 are 1x1 convs on the same input -> single fused GEMM.
    x1, x3, x4 = conv1x1_fused(x, [p["b1"], p["b3_1"], p["b4_1"]], act="relu")
    x2 = conv_bn_act(maxpool3x3(x), p["b2"], act="relu")
    x3 = conv_bn_act(x3, p["b3_2"], act="relu")
    x3 = conv_bn_act(x3, p["b3_3"], act="relu")
    x4 = conv_bn_act(x4, p["b4_2"], act="relu")
    x4 = conv_bn_act(x4, p["b4_3"], act="relu")
    return jnp.concatenate([x1, x2, x3, x4], axis=-1)


def heads_fwd(x, P):
    # pos/cos/sin/width heads: four 2x2 convs on the SAME feature map -> one
    # N=4 GEMM, per-head activations applied afterwards.  Final outputs in f32.
    B, H, W, C = x.shape
    patches, Ho, Wo = extract_patches(x, 2, 2, 1, ((0, 0), (0, 0)), 1)
    A = patches.reshape(B * Ho * Wo, 4 * C)
    Ws, scales, shifts = [], [], []
    for key in ("pos", "cos", "sin", "wid"):
        p = P[key]
        Ws.append(p["w"].transpose(2, 3, 1, 0).reshape(4 * C, 1))
        scales.append(p["scale"])
        shifts.append(p["shift"])
    y = matmul_scale_bias_act(A, jnp.concatenate(Ws, axis=1),
                              jnp.concatenate(scales),
                              jnp.concatenate(shifts), "none",
                              out_dtype=jnp.float32)
    y = y.reshape(B, Ho, Wo, 4)
    return (jax.nn.sigmoid(y[..., 0:1]), jnp.tanh(y[..., 1:2]),
            jnp.tanh(y[..., 2:3]), y[..., 3:4])


# ----------------------------------------------------------------------------
# Parameter construction (deterministic, synthetic; arrays only -> jit-friendly)
# ----------------------------------------------------------------------------
class KeyGen:
    def __init__(self, seed):
        self.key = jax.random.PRNGKey(seed)

    def __call__(self):
        self.key, k = jax.random.split(self.key)
        return k


def make_conv(kg, cin, cout, kh, kw, *, bias=True, bn=True):
    fan = cin * kh * kw
    w = jax.random.normal(kg(), (cout, cin, kh, kw), jnp.float32) / np.sqrt(fan)
    b = (jax.random.normal(kg(), (cout,), jnp.float32) * 0.01 if bias
         else jnp.zeros((cout,), jnp.float32))
    if bn:   # eval-mode BN with default gamma=1, beta=0, mean=0, var=1
        scale = jnp.full((cout,), BN_SCALE, jnp.float32)
        shift = b * BN_SCALE
    else:
        scale = jnp.ones((cout,), jnp.float32)
        shift = b
    return {"w": w, "scale": scale, "shift": shift}


def make_mff(kg, c, rate, reduction):
    del rate  # rate is an architecture constant; passed statically at call site
    hid = c // reduction
    bn_scale = jnp.full((c,), BN_SCALE, jnp.float32)
    bn_bias = jnp.zeros((c,), jnp.float32)
    layer2 = make_conv(kg, c, c, 1, 1)          # 1x1 conv + BN
    layer3 = make_conv(kg, c, c, 3, 3)          # dilated 3x3 conv + BN
    se_w1 = jax.random.normal(kg(), (c, hid), jnp.float32) / np.sqrt(c)
    se_w2 = jax.random.normal(kg(), (hid, c), jnp.float32) / np.sqrt(hid)
    rescale = make_conv(kg, 2 * c, c, 1, 1, bn=False)
    # Fold layer1 (BN), layer2 and layer3 into one GEMM over the 3x3 patches:
    # scale each layer's weight columns by its BN scale and add the 1x1 /
    # identity contributions at the centre-tap rows.
    w2 = layer2["w"].transpose(2, 3, 1, 0).reshape(c, c) * layer2["scale"][None, :]
    w3 = (layer3["w"].transpose(2, 3, 1, 0).reshape(9 * c, c)
          * layer3["scale"][None, :])
    center = 4 * c
    fused_w = w3.at[center:center + c, :].add(w2 + jnp.diag(bn_scale))
    fused_shift = layer2["shift"] + layer3["shift"] + bn_bias
    return {"fused_w": fused_w, "fused_shift": fused_shift,
            "se_w1": se_w1, "se_w2": se_w2, "rescale": rescale}


def make_aspp(kg, c):
    c0 = make_conv(kg, c, c, 1, 1, bias=False)
    a1 = make_conv(kg, c, c, 3, 3, bias=False)
    a2 = make_conv(kg, c, c, 3, 3, bias=False)
    a3 = make_conv(kg, c, c, 3, 3, bias=False)
    pool = make_conv(kg, c, c, 1, 1, bias=False)
    proj = make_conv(kg, 5 * c, c, 1, 1, bias=False)
    # Fold the 1x1 branch (c0) into the rate-6 dilated 3x3 branch (a1): the
    # centre tap of the dilated patch is the input pixel itself, so c0's weight
    # occupies rows [4c:5c] of a (9c, c) block; concatenate along N.
    w_a1 = a1["w"].transpose(2, 3, 1, 0).reshape(9 * c, c)
    w_c0 = jnp.zeros((9 * c, c), jnp.float32).at[4 * c:5 * c, :].set(
        c0["w"].transpose(2, 3, 1, 0).reshape(c, c))
    fused_w = jnp.concatenate([w_c0, w_a1], axis=1)            # (9c, 2c), c0 first
    fused_scale = jnp.concatenate([c0["scale"], a1["scale"]])
    fused_shift = jnp.concatenate([c0["shift"], a1["shift"]])
    return {
        "a1c0_w": fused_w, "a1c0_scale": fused_scale, "a1c0_shift": fused_shift,
        "a2": a2, "a3": a3, "pool": pool, "proj": proj,
    }


def make_mfa(kg, cin, c1, c2, c3, c4):
    return {
        "b1": make_conv(kg, cin, c1, 1, 1),
        "b2": make_conv(kg, cin, c2, 1, 1),
        "b3_1": make_conv(kg, cin, c3[0], 1, 1),
        "b3_2": make_conv(kg, c3[0], c3[1], 1, 3),
        "b3_3": make_conv(kg, c3[1], c3[2], 3, 1),
        "b4_1": make_conv(kg, cin, c4[0], 1, 1),
        "b4_2": make_conv(kg, c4[0], c4[1], 1, 7),
        "b4_3": make_conv(kg, c4[1], c4[2], 7, 1),
    }


def init_params(seed=0, cs=32, in1=1, in2=3, out_ch=1):
    kg = KeyGen(seed)
    P = {}
    P["d1"] = make_conv(kg, in1, cs, 3, 3)
    P["d2"] = make_conv(kg, cs, cs * 2, 3, 3)
    P["d3"] = make_conv(kg, cs * 2, cs * 4, 3, 3)
    P["d4"] = make_conv(kg, cs * 4, cs * 8, 3, 3)
    P["r1"] = make_conv(kg, in2, cs, 3, 3)
    P["r2"] = make_conv(kg, cs, cs * 2, 3, 3)
    P["r3"] = make_conv(kg, cs * 2, cs * 4, 3, 3)
    P["r4"] = make_conv(kg, cs * 4, cs * 8, 3, 3)
    P["mff1"] = make_mff(kg, 32, 1, 1)
    P["mff2"] = make_mff(kg, 64, 3, 2)
    P["mff3"] = make_mff(kg, 128, 5, 4)
    P["mff4"] = make_mff(kg, 256, 7, 8)
    P["rgbaspp"] = make_aspp(kg, 256)
    P["depthaspp"] = make_aspp(kg, 256)
    P["rescale"] = make_conv(kg, 512, 256, 1, 1, bn=False)
    P["mfa1"] = make_mfa(kg, 256, 32, 64, (128, 96, 64), (128, 96, 96))
    P["mfa2"] = make_mfa(kg, 128, 16, 32, (64, 48, 32), (64, 48, 48))
    P["mfa3"] = make_mfa(kg, 64, 8, 16, (32, 24, 16), (32, 24, 24))
    # ConvTranspose layers stored as equivalent forward-conv weights (+ fused BN)
    P["conv1"] = make_conv(kg, cs * 8, cs * 4, 3, 3)
    P["conv2"] = make_conv(kg, cs * 4, cs * 2, 3, 3)
    P["conv3"] = make_conv(kg, cs * 2, cs, 3, 3)
    P["conv4"] = make_conv(kg, cs, cs, 4, 4)
    P["pos"] = make_conv(kg, cs, out_ch, 2, 2, bn=False)
    P["cos"] = make_conv(kg, cs, out_ch, 2, 2, bn=False)
    P["sin"] = make_conv(kg, cs, out_ch, 2, 2, bn=False)
    P["wid"] = make_conv(kg, cs, out_ch, 2, 2, bn=False)
    return P


# ----------------------------------------------------------------------------
# Full Fusion forward (wrapped in ONE jax.jit by the caller)
# ----------------------------------------------------------------------------
def fusion_forward(P, x_in):
    # x_in: NCHW (B, 4, H, W); channels 0:3 = RGB, 3:4 = depth.
    x = jnp.transpose(x_in, (0, 2, 3, 1)).astype(jnp.float32)   # NHWC
    xr = x[..., :3]
    xd = x[..., 3:4]

    xd1 = conv_bn_act(xd, P["d1"], act="relu")
    xr1 = conv_bn_act(xr, P["r1"], act="relu")
    xf1 = mff_fwd(xd1, xr1, P["mff1"], 1)

    xd2 = conv_bn_act(xf1, P["d2"], stride=2, pad=(3, 3), dil=3, act="relu")
    xr2 = conv_bn_act(xr1, P["r2"], stride=2, pad=(3, 3), dil=3, act="relu")
    xf2 = mff_fwd(xd2, xr2, P["mff2"], 3)

    xd3 = conv_bn_act(xf2, P["d3"], stride=2, pad=(5, 5), dil=5, act="relu")
    xr3 = conv_bn_act(xr2, P["r3"], stride=2, pad=(5, 5), dil=5, act="relu")
    xf3 = mff_fwd(xd3, xr3, P["mff3"], 5)

    xd4 = conv_bn_act(xf3, P["d4"], stride=2, pad=(7, 7), dil=7, act="relu")
    xr4 = conv_bn_act(xr3, P["r4"], stride=2, pad=(7, 7), dil=7, act="relu")
    xf4 = mff_fwd(xd4, xr4, P["mff4"], 7)

    xrgb = jnp.maximum(aspp_fwd(xr4, P["rgbaspp"]), 0.0)
    xdep = jnp.maximum(aspp_fwd(xd4, P["depthaspp"]), 0.0)
    xconcat = conv_bn_act(jnp.concatenate([xrgb, xdep], axis=-1),
                          P["rescale"], act="none")

    xdec1 = jnp.maximum(mfa_fwd(xconcat + xf4, P["mfa1"]), 0.0)
    xdec1 = convT_bn_act(xdec1, P["conv1"], stride=2, padding=1,
                         output_padding=1, act="relu")
    xdec2 = jnp.maximum(mfa_fwd(xdec1 + xf3, P["mfa2"]), 0.0)
    xdec2 = convT_bn_act(xdec2, P["conv2"], stride=2, padding=1,
                         output_padding=1, act="relu")
    xdec3 = jnp.maximum(mfa_fwd(xdec2 + xf2, P["mfa3"]), 0.0)
    xdec3 = convT_bn_act(xdec3, P["conv3"], stride=2, padding=1,
                         output_padding=1, act="relu")
    out = convT_bn_act(xdec3, P["conv4"], stride=1, padding=1,
                       output_padding=0, act="relu")

    # dropout=False / p=0.0 in the reference config -> heads applied directly.
    pos, cos, sin, wid = heads_fwd(out, P)

    to_nchw = lambda t: jnp.transpose(t, (0, 3, 1, 2))
    return to_nchw(pos), to_nchw(cos), to_nchw(sin), to_nchw(wid)


# TODO(synk): im2col patch extraction, 3x3 maxpool, global-average-pool,
# channel concat/slice and transposed-conv zero insertion are pure
# data-movement glue kept in XLA; all GEMM-shaped compute (convs, fused
# heads / MFA 1x1 stems / MFF branch / ASPP 1x1+rate-6 branch) + BN +
# activation runs inside the Pallas kernel.


if __name__ == "__main__":
    # quick sanity check of the fused bf16 GEMM kernel against a jnp reference
    ka, kb = jax.random.split(jax.random.PRNGKey(1))
    a = jax.random.normal(ka, (37, 70), jnp.float32)
    b = jax.random.normal(kb, (70, 19), jnp.float32)
    ref = jnp.dot(a.astype(jnp.bfloat16).astype(jnp.float32),
                  b.astype(jnp.bfloat16).astype(jnp.float32),
                  precision=jax.lax.Precision.HIGHEST)
    got = jax.jit(lambda a, b: matmul_scale_bias_act(
        a, b, jnp.ones((19,), jnp.float32), jnp.zeros((19,), jnp.float32),
        "none", out_dtype=jnp.float32))(a, b)
    err = np.max(np.abs(np.asarray(got) - np.asarray(ref)))
    assert np.allclose(np.asarray(got), np.asarray(ref), atol=5e-3, rtol=5e-3), err

    key = jax.random.PRNGKey(0)
    B, S = 2, 32
    x_in = jax.random.normal(key, (B, 4, S, S), jnp.float32)
    params = init_params(seed=0)

    forward = jax.jit(fusion_forward)          # single jit over the whole net
    pos, cos, sin, wid = forward(params, x_in)
    jax.block_until_ready((pos, cos, sin, wid))

    assert pos.shape == (B, 1, S, S), pos.shape
    assert cos.shape == (B, 1, S, S)
    assert sin.shape == (B, 1, S, S)
    assert wid.shape == (B, 1, S, S)
    assert np.isfinite(np.asarray(pos)).all()
    assert np.isfinite(np.asarray(cos)).all()
    assert np.isfinite(np.asarray(sin)).all()
    assert np.isfinite(np.asarray(wid)).all()
    print("KERNEL_OK")
</pallas_src>

<mosaic_0001>
module attributes {stable_mosaic.version = 11 : i64} {
  func.func @_mm_kernel_k1(%arg0: i32, %arg1: i32, %arg2: memref<48x80xbf16, #tpu.memory_space<vmem>>, %arg3: memref<80x128xbf16, #tpu.memory_space<vmem>>, %arg4: memref<1x128xf32, #tpu.memory_space<vmem>>, %arg5: memref<1x128xf32, #tpu.memory_space<vmem>>, %arg6: memref<48x128xf32, #tpu.memory_space<vmem>>) attributes {dimension_semantics = [#tpu.dimension_semantics<parallel>, #tpu.dimension_semantics<parallel>], iteration_bounds = array<i64: 1, 1>, scalar_prefetch = 0 : i64, scratch_operands = 0 : i64, tpu.core_type = #tpu.core_type<tc>, window_params = [{transform_indices = @transform_0, window_bounds = array<i64: 48, 80>}, {transform_indices = @transform_1, window_bounds = array<i64: 80, 128>}, {transform_indices = @transform_2, window_bounds = array<i64: 1, 128>}, {transform_indices = @transform_3, window_bounds = array<i64: 1, 128>}, {transform_indices = @transform_4, window_bounds = array<i64: 48, 128>}]} {
    %c0 = arith.constant 0 : index
    %c0_0 = arith.constant 0 : index
    %0 = vector.load %arg2[%c0, %c0_0] : memref<48x80xbf16, #tpu.memory_space<vmem>>, vector<48x80xbf16>
    %c0_1 = arith.constant 0 : index
    %c0_2 = arith.constant 0 : index
    %1 = vector.load %arg3[%c0_1, %c0_2] : memref<80x128xbf16, #tpu.memory_space<vmem>>, vector<80x128xbf16>
    %cst = arith.constant dense<0.000000e+00> : vector<48x128xf32>
    %2 = tpu.matmul %0, %1, %cst {dimension_numbers = #tpu.dot_dimension_numbers<[1], [0], [0], [1], [0, 0, 1, 1], [], []>} : vector<48x80xbf16>, vector<80x128xbf16>, vector<48x128xf32> -> vector<48x128xf32>
    %c0_3 = arith.constant 0 : index
    %c0_4 = arith.constant 0 : index
    %3 = vector.load %arg4[%c0_3, %c0_4] : memref<1x128xf32, #tpu.memory_space<vmem>>, vector<1x128xf32>
    %4 = vector.broadcast %3 : vector<1x128xf32> to vector<48x128xf32>
    %5 = arith.mulf %2, %4 : vector<48x128xf32>
    %c0_5 = arith.constant 0 : index
    %c0_6 = arith.constant 0 : index
    %6 = vector.load %arg5[%c0_5, %c0_6] : memref<1x128xf32, #tpu.memory_space<vmem>>, vector<1x128xf32>
    %7 = vector.broadcast %6 : vector<1x128xf32> to vector<48x128xf32>
    %8 = arith.addf %5, %7 : vector<48x128xf32>
    %c0_7 = arith.constant 0 : index
    %c0_8 = arith.constant 0 : index
    %9 = vector.load %arg6[%c0_7, %c0_8] : memref<48x128xf32, #tpu.memory_space<vmem>>, vector<48x128xf32>
    tpu.vector_store %arg6[%c0_7, %c0_8], %8 {strides = array<i32>} : memref<48x128xf32, #tpu.memory_space<vmem>>, vector<48x128xf32>,
    return
  }
  func.func @transform_0(%arg0: i32, %arg1: i32) -> (i32, i32) {
    %c0_i32 = arith.constant 0 : i32
    %c0_i32_0 = arith.constant 0 : i32
    return %arg0, %c0_i32 : i32, i32
  }
  func.func @transform_1(%arg0: i32, %arg1: i32) -> (i32, i32) {
    %c0_i32 = arith.constant 0 : i32
    %c0_i32_0 = arith.constant 0 : i32
    return %c0_i32, %arg1 : i32, i32
  }
  func.func @transform_2(%arg0: i32, %arg1: i32) -> (i32, i32) {
    %c0_i32 = arith.constant 0 : i32
    %c0_i32_0 = arith.constant 0 : i32
    return %c0_i32, %arg1 : i32, i32
  }
  func.func @transform_3(%arg0: i32, %arg1: i32) -> (i32, i32) {
    %c0_i32 = arith.constant 0 : i32
    %c0_i32_0 = arith.constant 0 : i32
    return %c0_i32, %arg1 : i32, i32
  }
  func.func @transform_4(%arg0: i32, %arg1: i32) -> (i32, i32) {
    %c0_i32 = arith.constant 0 : i32
    return %arg0, %arg1 : i32, i32
  }
}

</mosaic_0001>

<llo_original>
// kernel: _lambda_.1
$region0: #{_lambda_.1}
  #allocation0 [shape = 'u32[]', space=smem, size = 0x4, offset = 0x4, fixed_abs, tag = 'smem constant byte address 0x4 - core index']
  #allocation1 [shape = 'u32[72,128]{1,0:T(1,128)}', space=vmem, size = 0x9000, scoped, tag = 'internal scratch']
  %s0 = inlined_call_operand.vmem [shape: bf16[48,80], index: 0, kind: input, shape index: {}]
  %s1 = inlined_call_operand.vmem [shape: bf16[80,128], index: 1, kind: input, shape index: {}]
  %s2 = inlined_call_operand.vmem [shape: f32[1,128], index: 2, kind: input, shape index: {}]
  %s3 = inlined_call_operand.vmem [shape: f32[1,128], index: 3, kind: input, shape index: {}]
  %s4 = inlined_call_operand.vmem [shape: f32[48,128], index: 4, kind: output, shape index: {}]
  %s5 = sld [smem:[#allocation0]]
  $region26: #{_lambda_.1} parent=0
    _
  %s7 = ssub.s32 1, %s5
  %s8 = scalar_select 0, %s7, %s5
  // Predicated region
  $region2: #{_lambda_.1} parent=0 // pred_check
    _
  $region3: #{_lambda_.1} parent=0 // pred_check_branch
    %10 = sbr.rel (0) target = $region5
  $region4: #{_lambda_.1} parent=0 // pred_region
    _
  $region5: #{_lambda_.1} parent=0 // pred_fallthru
    _
  // Predicated region
  $region6: #{_lambda_.1} parent=0 // pred_check
    _
  $region7: #{_lambda_.1} parent=0 // pred_check_branch
    %12 = sbr.rel (0) target = $region9
  $region8: #{_lambda_.1} parent=0 // pred_region
    _
  $region9: #{_lambda_.1} parent=0 // pred_fallthru
    _
  // Predicated region
  $region10: #{_lambda_.1} parent=0 // pred_check
    _
  $region11: #{_lambda_.1} parent=0 // pred_check_branch
    %14 = sbr.rel (0) target = $region13
  $region12: #{_lambda_.1} parent=0 // pred_region
    _
  $region13: #{_lambda_.1} parent=0 // pred_fallthru
    _
  // Predicated region
  $region14: #{_lambda_.1} parent=0 // pred_check
    _
  $region15: #{_lambda_.1} parent=0 // pred_check_branch
    %16 = sbr.rel (0) target = $region17
  $region16: #{_lambda_.1} parent=0 // pred_region
    _
  $region17: #{_lambda_.1} parent=0 // pred_fallthru
    _
  %v18 = vld [vmem:[%s0] sm:$0xf]
  %v19 = vld [vmem:[%s0 + $0x4] sm:$0xf]
  %v20 = vld [vmem:[%s0 + $0x8] sm:$0xf]
  %v21 = vld [vmem:[%s0 + $0xc] sm:$0xf]
  %v22 = vld [vmem:[%s0 + $0x10] sm:$0xf]
  %v23 = vld [vmem:[%s0 + $0x14] sm:$0xf]
  %v24 = vld [vmem:[%s1] sm:$0xf]
  %v25 = vld [vmem:[%s1 + $0x4] sm:$0xf]
  %v26 = vld [vmem:[%s1 + $0x8] sm:$0xf]
  %v27 = vld [vmem:[%s1 + $0xc] sm:$0xf]
  %v28 = vld [vmem:[%s1 + $0x10] sm:$0xf]
  %v29 = vld [vmem:[%s1 + $0x14] sm:$0xf]
  %v30 = vld [vmem:[%s1 + $0x18] sm:$0xf]
  %v31 = vld [vmem:[%s1 + $0x1c] sm:$0xf]
  %v32 = vld [vmem:[%s1 + $0x20] sm:$0xf]
  %v33 = vld [vmem:[%s1 + $0x24] sm:$0xf]
  %v40 = vunpack.c.l.b16 %v18
  %v41 = vunpack.c.l.b16 %v19
  %v42 = vunpack.c.l.b16 %v20
  %v43 = vunpack.c.l.b16 %v21
  %v44 = vunpack.c.l.b16 %v22
  %v45 = vunpack.c.l.b16 %v23
  %v46 = vpack.c.b16 %v41, %v40
  %v47 = vpack.c.b16 %v43, %v42
  %v48 = vpack.c.b16 %v45, %v44
  %v59 = vunpack.c.l.b16 %v24
  %v60 = vunpack.c.l.b16 %v25
  %v61 = vunpack.c.l.b16 %v26
  %v62 = vunpack.c.l.b16 %v27
  %v63 = vunpack.c.l.b16 %v28
  %v64 = vunpack.c.l.b16 %v29
  %v65 = vunpack.c.l.b16 %v30
  %v66 = vunpack.c.l.b16 %v31
  %v67 = vunpack.c.l.b16 %v32
  %v68 = vunpack.c.l.b16 %v33
  %v69 = vpack.c.b16 %v60, %v59
  %v70 = vpack.c.b16 %v62, %v61
  %v71 = vpack.c.b16 %v64, %v63
  %v72 = vpack.c.b16 %v66, %v65
  %v73 = vpack.c.b16 %v68, %v67
  %vm79 = vcmask 654336
  %v81 = vsel %vm79, %v46, 0
  %v84 = vsel %vm79, %v47, 0
  %v87 = vsel %vm79, %v48, 0
  %89 = vmatpush.bf16.msra.mxu0 0
  %90 = vmatpush.bf16.msra.mxu0 0
  %91 = vmatpush.bf16.msra.mxu0 0
  %92 = vmatpush.bf16.msra.mxu0 %v73
  %93 = vmatpush.bf16.msra.mxu0 %v72
  %94 = vmatpush.bf16.msra.mxu0 %v71
  %95 = vmatpush.bf16.msra.mxu0 %v70
  %96 = vmatpush.bf16.msra.mxu0 %v69
  %97 = vmatmul.bf16.gmra.mxu0 %v81
  %v98 = vpop.f32.mrf.mxu0
  %v99 = vadd.f32 0.0, %v98
  %v100 = vpop.f32.mrf.mxu0
  %v101 = vadd.f32 0.0, %v100
  %102 = vmatmul.bf16.gmra.mxu0 %v84
  %v103 = vpop.f32.mrf.mxu0
  %v104 = vadd.f32 0.0, %v103
  %v105 = vpop.f32.mrf.mxu0
  %v106 = vadd.f32 0.0, %v105
  %107 = vmatmul.bf16.gmra.mxu0 %v87
  %v108 = vpop.f32.mrf.mxu0
  %v109 = vadd.f32 0.0, %v108
  %v110 = vpop.f32.mrf.mxu0
  %v111 = vadd.f32 0.0, %v110
  %112 = vdwg.mxu0
  %v113 = vld [vmem:[%s2] sm:$0x1]
  %v115 = vperm.slane %v113, 0
  %v117 = vmul.f32 %v99, %v115
  %v118 = vmul.f32 %v101, %v115
  %v119 = vmul.f32 %v104, %v115
  %v120 = vmul.f32 %v106, %v115
  %v121 = vmul.f32 %v109, %v115
  %v122 = vmul.f32 %v111, %v115
  %v123 = vld [vmem:[%s3] sm:$0x1]
  %v125 = vperm.slane %v123, 0
  %v127 = vadd.f32 %v117, %v125
  %v128 = vadd.f32 %v118, %v125
  %v129 = vadd.f32 %v119, %v125
  %v130 = vadd.f32 %v120, %v125
  %v131 = vadd.f32 %v121, %v125
  %v132 = vadd.f32 %v122, %v125
  %133 = vst [vmem:[%s4] sm:$0xff] %v127
  %134 = vst [vmem:[%s4 + $0x8] sm:$0xff] %v128
  %135 = vst [vmem:[%s4 + $0x10] sm:$0xff] %v129
  %136 = vst [vmem:[%s4 + $0x18] sm:$0xff] %v130
  %137 = vst [vmem:[%s4 + $0x20] sm:$0xff] %v131
  %138 = vst [vmem:[%s4 + $0x28] sm:$0xff] %v132
  // Predicated region
  $region18: #{_lambda_.1} parent=0 // pred_check
    _
  $region19: #{_lambda_.1} parent=0 // pred_check_branch
    %140 = sbr.rel (0) target = $region21
  $region20: #{_lambda_.1} parent=0 // pred_region
    _
  $region21: #{_lambda_.1} parent=0 // pred_fallthru
    _
  // Predicated region
  $region22: #{_lambda_.1} parent=0 // pred_check
    _
  $region23: #{_lambda_.1} parent=0 // pred_check_branch
    %142 = sbr.rel (0) target = $region25
  $region24: #{_lambda_.1} parent=0 // pred_region
    _
  $region25: #{_lambda_.1} parent=0 // pred_fallthru
    _

</llo_original>
